<compile_context>
chip_gen: v7x
topology: tpu7x:2x2x1
jax: 0.10.0
libtpu: 0.0.40
codegen_flags: <defaults>
</compile_context>

<pallas_src>
import jax
import jax.numpy as jnp
from jax.experimental import pallas as pl
from jax.experimental.pallas import tpu as pltpu


def _round_up(x: int, m: int) -> int:
    return (x + m - 1) // m * m


def _readout_kernel(x_ref, w_ref, b_ref, o_ref):
    # x_ref: (nb, c, tt, WH)   native dtype (f32 here)
    # w_ref: (c, WH, Dp)       fused |masks| * features, resident across the grid
    # b_ref: (1, Dp)           f32 bias (lane-padded)
    # o_ref: (nb, tt, Dp)
    nb = x_ref.shape[0]
    c = x_ref.shape[1]
    cdt = w_ref.dtype                      # compute dtype (bf16 or f32)
    b = b_ref[...]                         # (1, Dp), broadcasts over rows
    for ni in range(nb):                   # nb is small & static -> unrolled
        # In-kernel cast of the x tile to the weight dtype (bf16 path) is a
        # cheap VPU op hidden under the tile DMA; it is a no-op on the f32 path.
        acc = jnp.dot(x_ref[ni, 0].astype(cdt), w_ref[0],
                      preferred_element_type=jnp.float32)
        for ci in range(1, c):             # unrolled MXU matmuls, f32 accumulate
            acc = acc + jnp.dot(x_ref[ni, ci].astype(cdt), w_ref[ci],
                                preferred_element_type=jnp.float32)
        o_ref[ni] = jax.nn.softplus(acc + b).astype(o_ref.dtype)


_VMEM_BLOCK_BUDGET = 8 * 1024 * 1024      # budget for the double-buffered x block


def _pick_row_tile(t: int, c: int, wh: int, itemsize: int, tt_default: int) -> int:
    """Row (time) tile: the whole extent when small, else a large multiple of 16."""
    if t <= tt_default:
        return t                           # full-extent block is always layout-legal
    tt = _round_up(tt_default, 16)         # 16 keeps bf16 sublane packing unmasked (v5e)
    while 2 * c * tt * wh * itemsize > _VMEM_BLOCK_BUDGET and tt > 16:
        tt = max(16, _round_up(tt // 2, 16))
    return tt


def _pick_batch_tile(n: int, c: int, tt: int, wh: int, itemsize: int) -> int:
    """Batch several n per grid step while the x block stays comfortably in VMEM."""
    for cand in range(n, 0, -1):
        if n % cand == 0 and 2 * cand * c * tt * wh * itemsize <= _VMEM_BLOCK_BUDGET:
            return cand
    return 1


def spatial_x_feature3d_forward(x, masks, features, bias, *,
                                tt=512, use_bf16=True, out_dtype=None):
    """SpatialXFeature3d forward (default config).

    x: (N, c, t, w, h); masks: (w, h, D); features: (1, c, 1, D); bias: (D,)
    returns (N, t, D) = softplus(((x @ |masks|) * features).sum(c) + bias)
    """
    N, c, t, w, h = x.shape
    D = masks.shape[-1]
    WH = w * h
    Dp = _round_up(D, 128)                 # lane-dense output / MXU N dim
    out_dtype = x.dtype if out_dtype is None else out_dtype

    # --- parameter fusion (tiny, plain JAX): W[c, wh, d] = |masks|[wh, d] * feat[c, d]
    # NOTE: if masks/features are static parameters, hoist w_fused/bias_p out of
    # the per-call path and reuse them across calls.
    param_dtype = jnp.bfloat16 if use_bf16 else jnp.float32
    masks_abs = jnp.abs(masks).astype(jnp.float32).reshape(WH, D)      # get_masks() -> abs
    feat = features.astype(jnp.float32).reshape(c, D)
    w_fused = (masks_abs[None, :, :] * feat[:, None, :]).astype(param_dtype)
    w_fused = jnp.pad(w_fused, ((0, 0), (0, 0), (0, Dp - D)))          # (c, WH, Dp)
    bias_p = jnp.pad(bias.astype(jnp.float32).reshape(1, D),
                     ((0, 0), (0, Dp - D)))                            # (1, Dp)

    # --- x stays in its native dtype & layout; collapsing (w, h) is a free reshape.
    x_rows = x.reshape(N, c, t, WH)

    itemsize = x_rows.dtype.itemsize
    tt_eff = _pick_row_tile(t, c, WH, itemsize, tt)
    nb = _pick_batch_tile(N, c, tt_eff, WH, itemsize)
    grid = (N // nb, pl.cdiv(t, tt_eff))
    n_steps = grid[0] * grid[1]

    # With tiny per-step compute and many steps, a third input buffer hides the
    # DMA issue latency at step boundaries (never triggers for the demo shape).
    x_spec_kwargs = {}
    if nb * tt_eff <= 64 and n_steps > 2:
        x_spec_kwargs["pipeline_mode"] = pl.Buffered(3)

    out = pl.pallas_call(
        _readout_kernel,
        out_shape=jax.ShapeDtypeStruct((N, t, Dp), out_dtype),
        grid=grid,
        in_specs=[
            # x tile: (nb, c, tt, WH); last two dims are sublane/lane dense
            pl.BlockSpec((nb, c, tt_eff, WH),
                         lambda n, ti: (n, 0, ti, 0), **x_spec_kwargs),
            # fused weights: resident across the whole grid
            pl.BlockSpec((c, WH, Dp), lambda n, ti: (0, 0, 0)),
            # bias (lane-padded to Dp)
            pl.BlockSpec((1, Dp), lambda n, ti: (0, 0)),
        ],
        out_specs=pl.BlockSpec((nb, tt_eff, Dp), lambda n, ti: (n, ti, 0)),
        compiler_params=pltpu.CompilerParams(
            dimension_semantics=("parallel", "parallel")),
    )(x_rows, w_fused, bias_p)

    # Drop the lane padding of D.  Any ragged t edge is handled by Pallas
    # masked stores, so no t-slicing / materialised pad is needed.
    return out[..., :D]


def _reference_forward(x, masks, features, bias):
    masks_abs = jnp.abs(masks)
    y = jnp.einsum("nctwh,whd->nctd", x, masks_abs,
                   precision=jax.lax.Precision.HIGHEST)
    y = (y * features).sum(axis=1)
    y = y + bias
    return jax.nn.softplus(y)


if __name__ == "__main__":
    # Module config: in_shape (c, t, w, h) = (4, 8, 16, 16), outdims = 32.
    N, c, t, w, h, outdims = 2, 4, 8, 16, 16, 32

    key = jax.random.PRNGKey(0)
    kx, km, kf = jax.random.split(key, 3)

    x = jax.random.normal(kx, (N, c, t, w, h), dtype=jnp.float32)

    # Deterministic parameter init mirroring SpatialXFeature3d.initialize():
    #   masks ~ N(0, 0.01), features ~ N(0, 0.01), bias = 0
    masks = 0.01 * jax.random.normal(km, (w, h, outdims), dtype=jnp.float32)
    features = 0.01 * jax.random.normal(kf, (1, c, 1, outdims), dtype=jnp.float32)
    bias = jnp.zeros((outdims,), dtype=jnp.float32)

    ref = _reference_forward(x, masks, features, bias)

    # f32 path: tight tolerance
    out_f32 = jax.block_until_ready(
        spatial_x_feature3d_forward(x, masks, features, bias, use_bf16=False))
    assert out_f32.shape == (N, t, outdims)
    assert jnp.allclose(out_f32, ref, atol=1e-4, rtol=1e-4), \
        float(jnp.max(jnp.abs(out_f32 - ref)))

    # bf16 weights + in-kernel bf16 cast of x (default): looser tolerance for
    # the reduced compute precision (no extra HBM pass over x either way).
    out_bf16 = jax.block_until_ready(
        spatial_x_feature3d_forward(x, masks, features, bias, use_bf16=True))
    assert out_bf16.shape == (N, t, outdims)
    assert jnp.allclose(out_bf16, ref, atol=1e-2, rtol=1e-2), \
        float(jnp.max(jnp.abs(out_bf16 - ref)))

    print("KERNEL_OK")
</pallas_src>

<mosaic_0001>
module attributes {stable_mosaic.version = 11 : i64} {
  func.func @_readout_kernel(%arg0: i32, %arg1: i32, %arg2: memref<2x4x8x256xf32, #tpu.memory_space<vmem>>, %arg3: memref<4x256x128xf32, #tpu.memory_space<vmem>>, %arg4: memref<1x128xf32, #tpu.memory_space<vmem>>, %arg5: memref<2x8x128xf32, #tpu.memory_space<vmem>>) attributes {dimension_semantics = [#tpu.dimension_semantics<parallel>, #tpu.dimension_semantics<parallel>], iteration_bounds = array<i64: 1, 1>, scalar_prefetch = 0 : i64, scratch_operands = 0 : i64, tpu.core_type = #tpu.core_type<tc>, window_params = [{transform_indices = @transform_0, window_bounds = array<i64: 2, 4, 8, 256>}, {pipeline_mode = #tpu.pipeline_mode<synchronous>, transform_indices = @transform_1, window_bounds = array<i64: 4, 256, 128>}, {pipeline_mode = #tpu.pipeline_mode<synchronous>, transform_indices = @transform_2, window_bounds = array<i64: 1, 128>}, {transform_indices = @transform_3, window_bounds = array<i64: 2, 8, 128>}]} {
    %c0 = arith.constant 0 : index
    %c0_0 = arith.constant 0 : index
    %0 = vector.load %arg4[%c0, %c0_0] : memref<1x128xf32, #tpu.memory_space<vmem>>, vector<1x128xf32>
    %c0_1 = arith.constant 0 : index
    %c0_2 = arith.constant 0 : index
    %c0_3 = arith.constant 0 : index
    %c0_4 = arith.constant 0 : index
    %1 = vector.load %arg2[%c0_1, %c0_2, %c0_3, %c0_4] : memref<2x4x8x256xf32, #tpu.memory_space<vmem>>, vector<1x1x8x256xf32>
    %2 = vector.shape_cast %1 : vector<1x1x8x256xf32> to vector<8x256xf32>
    %c0_5 = arith.constant 0 : index
    %c0_6 = arith.constant 0 : index
    %c0_7 = arith.constant 0 : index
    %3 = vector.load %arg3[%c0_5, %c0_6, %c0_7] : memref<4x256x128xf32, #tpu.memory_space<vmem>>, vector<1x256x128xf32>
    %4 = vector.shape_cast %3 : vector<1x256x128xf32> to vector<256x128xf32>
    %cst = arith.constant dense<0.000000e+00> : vector<8x128xf32>
    %5 = tpu.matmul %2, %4, %cst {dimension_numbers = #tpu.dot_dimension_numbers<[1], [0], [0], [1], [0, 0, 1, 1], [], []>} : vector<8x256xf32>, vector<256x128xf32>, vector<8x128xf32> -> vector<8x128xf32>
    %c0_8 = arith.constant 0 : index
    %c1 = arith.constant 1 : index
    %c0_9 = arith.constant 0 : index
    %c0_10 = arith.constant 0 : index
    %6 = vector.load %arg2[%c0_8, %c1, %c0_9, %c0_10] : memref<2x4x8x256xf32, #tpu.memory_space<vmem>>, vector<1x1x8x256xf32>
    %7 = vector.shape_cast %6 : vector<1x1x8x256xf32> to vector<8x256xf32>
    %c1_11 = arith.constant 1 : index
    %c0_12 = arith.constant 0 : index
    %c0_13 = arith.constant 0 : index
    %8 = vector.load %arg3[%c1_11, %c0_12, %c0_13] : memref<4x256x128xf32, #tpu.memory_space<vmem>>, vector<1x256x128xf32>
    %9 = vector.shape_cast %8 : vector<1x256x128xf32> to vector<256x128xf32>
    %cst_14 = arith.constant dense<0.000000e+00> : vector<8x128xf32>
    %10 = tpu.matmul %7, %9, %cst_14 {dimension_numbers = #tpu.dot_dimension_numbers<[1], [0], [0], [1], [0, 0, 1, 1], [], []>} : vector<8x256xf32>, vector<256x128xf32>, vector<8x128xf32> -> vector<8x128xf32>
    %11 = arith.addf %5, %10 : vector<8x128xf32>
    %c0_15 = arith.constant 0 : index
    %c2 = arith.constant 2 : index
    %c0_16 = arith.constant 0 : index
    %c0_17 = arith.constant 0 : index
    %12 = vector.load %arg2[%c0_15, %c2, %c0_16, %c0_17] : memref<2x4x8x256xf32, #tpu.memory_space<vmem>>, vector<1x1x8x256xf32>
    %13 = vector.shape_cast %12 : vector<1x1x8x256xf32> to vector<8x256xf32>
    %c2_18 = arith.constant 2 : index
    %c0_19 = arith.constant 0 : index
    %c0_20 = arith.constant 0 : index
    %14 = vector.load %arg3[%c2_18, %c0_19, %c0_20] : memref<4x256x128xf32, #tpu.memory_space<vmem>>, vector<1x256x128xf32>
    %15 = vector.shape_cast %14 : vector<1x256x128xf32> to vector<256x128xf32>
    %cst_21 = arith.constant dense<0.000000e+00> : vector<8x128xf32>
    %16 = tpu.matmul %13, %15, %cst_21 {dimension_numbers = #tpu.dot_dimension_numbers<[1], [0], [0], [1], [0, 0, 1, 1], [], []>} : vector<8x256xf32>, vector<256x128xf32>, vector<8x128xf32> -> vector<8x128xf32>
    %17 = arith.addf %11, %16 : vector<8x128xf32>
    %c0_22 = arith.constant 0 : index
    %c3 = arith.constant 3 : index
    %c0_23 = arith.constant 0 : index
    %c0_24 = arith.constant 0 : index
    %18 = vector.load %arg2[%c0_22, %c3, %c0_23, %c0_24] : memref<2x4x8x256xf32, #tpu.memory_space<vmem>>, vector<1x1x8x256xf32>
    %19 = vector.shape_cast %18 : vector<1x1x8x256xf32> to vector<8x256xf32>
    %c3_25 = arith.constant 3 : index
    %c0_26 = arith.constant 0 : index
    %c0_27 = arith.constant 0 : index
    %20 = vector.load %arg3[%c3_25, %c0_26, %c0_27] : memref<4x256x128xf32, #tpu.memory_space<vmem>>, vector<1x256x128xf32>
    %21 = vector.shape_cast %20 : vector<1x256x128xf32> to vector<256x128xf32>
    %cst_28 = arith.constant dense<0.000000e+00> : vector<8x128xf32>
    %22 = tpu.matmul %19, %21, %cst_28 {dimension_numbers = #tpu.dot_dimension_numbers<[1], [0], [0], [1], [0, 0, 1, 1], [], []>} : vector<8x256xf32>, vector<256x128xf32>, vector<8x128xf32> -> vector<8x128xf32>
    %23 = arith.addf %17, %22 : vector<8x128xf32>
    %24 = vector.broadcast %0 : vector<1x128xf32> to vector<8x128xf32>
    %25 = arith.addf %23, %24 : vector<8x128xf32>
    %cst_29 = arith.constant 0.000000e+00 : f32
    %26 = vector.broadcast %cst_29 : f32 to vector<8x128xf32>
    %27 = arith.maximumf %25, %26 : vector<8x128xf32>
    %28 = vector.broadcast %cst_29 : f32 to vector<8x128xf32>
    %29 = arith.subf %25, %28 : vector<8x128xf32>
    %30 = arith.cmpf one, %29, %29 : vector<8x128xf32>
    %31 = vector.broadcast %cst_29 : f32 to vector<8x128xf32>
    %32 = arith.addf %25, %31 : vector<8x128xf32>
    %33 = math.absf %29 : vector<8x128xf32>
    %cst_30 = arith.constant 0.000000e+00 : f32
    %34 = vector.broadcast %cst_30 : f32 to vector<8x128xf32>
    %35 = arith.subf %34, %33 : vector<8x128xf32>
    %36 = math.exp %35 : vector<8x128xf32>
    %37 = math.log1p %36 : vector<8x128xf32>
    %38 = arith.addf %27, %37 : vector<8x128xf32>
    %39 = arith.select %30, %32, %38 : vector<8x128xi1>, vector<8x128xf32>
    %c0_31 = arith.constant 0 : index
    %c0_32 = arith.constant 0 : index
    %c0_33 = arith.constant 0 : index
    %40 = vector.load %arg5[%c0_31, %c0_32, %c0_33] : memref<2x8x128xf32, #tpu.memory_space<vmem>>, vector<1x8x128xf32>
    %41 = vector.shape_cast %40 : vector<1x8x128xf32> to vector<8x128xf32>
    %42 = vector.shape_cast %39 : vector<8x128xf32> to vector<1x8x128xf32>
    tpu.vector_store %arg5[%c0_31, %c0_32, %c0_33], %42 {strides = array<i32>} : memref<2x8x128xf32, #tpu.memory_space<vmem>>, vector<1x8x128xf32>,
    %c1_34 = arith.constant 1 : index
    %c0_35 = arith.constant 0 : index
    %c0_36 = arith.constant 0 : index
    %c0_37 = arith.constant 0 : index
    %43 = vector.load %arg2[%c1_34, %c0_35, %c0_36, %c0_37] : memref<2x4x8x256xf32, #tpu.memory_space<vmem>>, vector<1x1x8x256xf32>
    %44 = vector.shape_cast %43 : vector<1x1x8x256xf32> to vector<8x256xf32>
    %c0_38 = arith.constant 0 : index
    %c0_39 = arith.constant 0 : index
    %c0_40 = arith.constant 0 : index
    %45 = vector.load %arg3[%c0_38, %c0_39, %c0_40] : memref<4x256x128xf32, #tpu.memory_space<vmem>>, vector<1x256x128xf32>
    %46 = vector.shape_cast %45 : vector<1x256x128xf32> to vector<256x128xf32>
    %cst_41 = arith.constant dense<0.000000e+00> : vector<8x128xf32>
    %47 = tpu.matmul %44, %46, %cst_41 {dimension_numbers = #tpu.dot_dimension_numbers<[1], [0], [0], [1], [0, 0, 1, 1], [], []>} : vector<8x256xf32>, vector<256x128xf32>, vector<8x128xf32> -> vector<8x128xf32>
    %c1_42 = arith.constant 1 : index
    %c1_43 = arith.constant 1 : index
    %c0_44 = arith.constant 0 : index
    %c0_45 = arith.constant 0 : index
    %48 = vector.load %arg2[%c1_42, %c1_43, %c0_44, %c0_45] : memref<2x4x8x256xf32, #tpu.memory_space<vmem>>, vector<1x1x8x256xf32>
    %49 = vector.shape_cast %48 : vector<1x1x8x256xf32> to vector<8x256xf32>
    %c1_46 = arith.constant 1 : index
    %c0_47 = arith.constant 0 : index
    %c0_48 = arith.constant 0 : index
    %50 = vector.load %arg3[%c1_46, %c0_47, %c0_48] : memref<4x256x128xf32, #tpu.memory_space<vmem>>, vector<1x256x128xf32>
    %51 = vector.shape_cast %50 : vector<1x256x128xf32> to vector<256x128xf32>
    %cst_49 = arith.constant dense<0.000000e+00> : vector<8x128xf32>
    %52 = tpu.matmul %49, %51, %cst_49 {dimension_numbers = #tpu.dot_dimension_numbers<[1], [0], [0], [1], [0, 0, 1, 1], [], []>} : vector<8x256xf32>, vector<256x128xf32>, vector<8x128xf32> -> vector<8x128xf32>
    %53 = arith.addf %47, %52 : vector<8x128xf32>
    %c1_50 = arith.constant 1 : index
    %c2_51 = arith.constant 2 : index
    %c0_52 = arith.constant 0 : index
    %c0_53 = arith.constant 0 : index
    %54 = vector.load %arg2[%c1_50, %c2_51, %c0_52, %c0_53] : memref<2x4x8x256xf32, #tpu.memory_space<vmem>>, vector<1x1x8x256xf32>
    %55 = vector.shape_cast %54 : vector<1x1x8x256xf32> to vector<8x256xf32>
    %c2_54 = arith.constant 2 : index
    %c0_55 = arith.constant 0 : index
    %c0_56 = arith.constant 0 : index
    %56 = vector.load %arg3[%c2_54, %c0_55, %c0_56] : memref<4x256x128xf32, #tpu.memory_space<vmem>>, vector<1x256x128xf32>
    %57 = vector.shape_cast %56 : vector<1x256x128xf32> to vector<256x128xf32>
    %cst_57 = arith.constant dense<0.000000e+00> : vector<8x128xf32>
    %58 = tpu.matmul %55, %57, %cst_57 {dimension_numbers = #tpu.dot_dimension_numbers<[1], [0], [0], [1], [0, 0, 1, 1], [], []>} : vector<8x256xf32>, vector<256x128xf32>, vector<8x128xf32> -> vector<8x128xf32>
    %59 = arith.addf %53, %58 : vector<8x128xf32>
    %c1_58 = arith.constant 1 : index
    %c3_59 = arith.constant 3 : index
    %c0_60 = arith.constant 0 : index
    %c0_61 = arith.constant 0 : index
    %60 = vector.load %arg2[%c1_58, %c3_59, %c0_60, %c0_61] : memref<2x4x8x256xf32, #tpu.memory_space<vmem>>, vector<1x1x8x256xf32>
    %61 = vector.shape_cast %60 : vector<1x1x8x256xf32> to vector<8x256xf32>
    %c3_62 = arith.constant 3 : index
    %c0_63 = arith.constant 0 : index
    %c0_64 = arith.constant 0 : index
    %62 = vector.load %arg3[%c3_62, %c0_63, %c0_64] : memref<4x256x128xf32, #tpu.memory_space<vmem>>, vector<1x256x128xf32>
    %63 = vector.shape_cast %62 : vector<1x256x128xf32> to vector<256x128xf32>
    %cst_65 = arith.constant dense<0.000000e+00> : vector<8x128xf32>
    %64 = tpu.matmul %61, %63, %cst_65 {dimension_numbers = #tpu.dot_dimension_numbers<[1], [0], [0], [1], [0, 0, 1, 1], [], []>} : vector<8x256xf32>, vector<256x128xf32>, vector<8x128xf32> -> vector<8x128xf32>
    %65 = arith.addf %59, %64 : vector<8x128xf32>
    %66 = vector.broadcast %0 : vector<1x128xf32> to vector<8x128xf32>
    %67 = arith.addf %65, %66 : vector<8x128xf32>
    %cst_66 = arith.constant 0.000000e+00 : f32
    %68 = vector.broadcast %cst_66 : f32 to vector<8x128xf32>
    %69 = arith.maximumf %67, %68 : vector<8x128xf32>
    %70 = vector.broadcast %cst_66 : f32 to vector<8x128xf32>
    %71 = arith.subf %67, %70 : vector<8x128xf32>
    %72 = arith.cmpf one, %71, %71 : vector<8x128xf32>
    %73 = vector.broadcast %cst_66 : f32 to vector<8x128xf32>
    %74 = arith.addf %67, %73 : vector<8x128xf32>
    %75 = math.absf %71 : vector<8x128xf32>
    %cst_67 = arith.constant 0.000000e+00 : f32
    %76 = vector.broadcast %cst_67 : f32 to vector<8x128xf32>
    %77 = arith.subf %76, %75 : vector<8x128xf32>
    %78 = math.exp %77 : vector<8x128xf32>
    %79 = math.log1p %78 : vector<8x128xf32>
    %80 = arith.addf %69, %79 : vector<8x128xf32>
    %81 = arith.select %72, %74, %80 : vector<8x128xi1>, vector<8x128xf32>
    %c1_68 = arith.constant 1 : index
    %c0_69 = arith.constant 0 : index
    %c0_70 = arith.constant 0 : index
    %82 = vector.load %arg5[%c1_68, %c0_69, %c0_70] : memref<2x8x128xf32, #tpu.memory_space<vmem>>, vector<1x8x128xf32>
    %83 = vector.shape_cast %82 : vector<1x8x128xf32> to vector<8x128xf32>
    %84 = vector.shape_cast %81 : vector<8x128xf32> to vector<1x8x128xf32>
    tpu.vector_store %arg5[%c1_68, %c0_69, %c0_70], %84 {strides = array<i32>} : memref<2x8x128xf32, #tpu.memory_space<vmem>>, vector<1x8x128xf32>,
    return
  }
  func.func @transform_0(%arg0: i32, %arg1: i32) -> (i32, i32, i32, i32) {
    %c0_i32 = arith.constant 0 : i32
    %c0_i32_0 = arith.constant 0 : i32
    %c0_i32_1 = arith.constant 0 : i32
    return %arg0, %c0_i32, %arg1, %c0_i32_0 : i32, i32, i32, i32
  }
  func.func @transform_1(%arg0: i32, %arg1: i32) -> (i32, i32, i32) {
    %c0_i32 = arith.constant 0 : i32
    %c0_i32_0 = arith.constant 0 : i32
    %c0_i32_1 = arith.constant 0 : i32
    %c0_i32_2 = arith.constant 0 : i32
    return %c0_i32, %c0_i32_0, %c0_i32_1 : i32, i32, i32
  }
  func.func @transform_2(%arg0: i32, %arg1: i32) -> (i32, i32) {
    %c0_i32 = arith.constant 0 : i32
    %c0_i32_0 = arith.constant 0 : i32
    %c0_i32_1 = arith.constant 0 : i32
    return %c0_i32, %c0_i32_0 : i32, i32
  }
  func.func @transform_3(%arg0: i32, %arg1: i32) -> (i32, i32, i32) {
    %c0_i32 = arith.constant 0 : i32
    %c0_i32_0 = arith.constant 0 : i32
    return %arg0, %arg1, %c0_i32 : i32, i32, i32
  }
}

</mosaic_0001>

<llo_original>
// kernel: tpu_custom_call.1
$region0: #{tpu_custom_call.1}
  #allocation0 [shape = 'u32[]', space=smem, size = 0x4, offset = 0x4, fixed_abs, tag = 'smem constant byte address 0x4 - core index']
  #allocation1 [shape = 'u32[144,128]{1,0:T(1,128)}', space=vmem, size = 0x12000, scoped, tag = 'internal scratch']
  %s0 = inlined_call_operand.hbm [shape: f32[2,4,8,256], index: 0, kind: input, shape index: {}]
  %s1 = inlined_call_operand.hbm [shape: f32[4,256,128], index: 1, kind: input, shape index: {}]
  %s2 = inlined_call_operand.vmem [shape: f32[1,128], index: 2, kind: input, shape index: {}]
  %s3 = inlined_call_operand.hbm [shape: f32[2,8,128], index: 3, kind: output, shape index: {}]
  %s4 = sld [smem:[#allocation0]]
  $region30: #{tpu_custom_call.1} parent=0
    _
  %s6 = ssub.s32 1, %s4
  %s7 = scalar_select 0, %s6, %s4
  $region1: #{tpu_custom_call.1} parent=0
    #allocation2 [shape = 'u8[65536]{0}', space=vmem, size = 0x10000, scoped, tag = 'input window, operand 0, single buffered']
    #allocation3 [shape = 's32[1]{0}', space=sflag, size = 0x4, scoped, tag = 'scoped memory for tpu_custom_call.1']
    #allocation4 [shape = 's32[1]{0}', space=sflag, size = 0x4, scoped, tag = 'scoped memory for tpu_custom_call.1']
    #allocation5 [shape = 'u8[524288]{0}', space=vmem, size = 0x80000, scoped, tag = 'input window, operand 1, single buffered']
    #allocation6 [shape = 's32[1]{0}', space=sflag, size = 0x4, scoped, tag = 'scoped memory for tpu_custom_call.1']
    #allocation7 [shape = 'u8[8192]{0}', space=vmem, size = 0x2000, scoped, tag = 'output window, operand 0, single buffered']
    %8 = vsyncpa [#allocation3], 0
    %9 = vsyncpa [#allocation6], 0
    %10 = vsyncpa [#allocation4], 0
    // Predicated region
    $region2: #{tpu_custom_call.1} parent=1 // pred_check
      _
    $region3: #{tpu_custom_call.1} parent=1 // pred_check_branch
      %12 = sbr.rel (0) target = $region5
    $region4: #{tpu_custom_call.1} parent=1 // pred_region
      %s14 = ssub.s32 2048, 2048
      %15 = vsyncadd [#allocation3], %s14
      %s16 = sshll.u32 [#allocation2], 4
      %s17 = int_to_ptr.vmem [resolvable:$true] %s16
      %22 = dma.hbm_to_vmem [thread:$0]  %s0, 2048, %s17, [#allocation3], 256, 256, 16
    $region5: #{tpu_custom_call.1} parent=1 // pred_fallthru
      _
    // Predicated region
    $region6: #{tpu_custom_call.1} parent=1 // pred_check
      _
    $region7: #{tpu_custom_call.1} parent=1 // pred_check_branch
      %24 = sbr.rel (0) target = $region9
    $region8: #{tpu_custom_call.1} parent=1 // pred_region
      %s26 = ssub.s32 16384, 16384
      %27 = vsyncadd [#allocation6], %s26
      %s28 = sshll.u32 [#allocation5], 4
      %s29 = int_to_ptr.vmem [resolvable:$true] %s28
      %34 = dma.hbm_to_vmem [thread:$0]  %s1, 16384, %s29, [#allocation6], 128, 128, 8
    $region9: #{tpu_custom_call.1} parent=1 // pred_fallthru
      _
    // Predicated region
    $region10: #{tpu_custom_call.1} parent=1 // pred_check
      _
    $region11: #{tpu_custom_call.1} parent=1 // pred_check_branch
      %36 = sbr.rel (0) target = $region13
    $region12: #{tpu_custom_call.1} parent=1 // pred_region
      _
    $region13: #{tpu_custom_call.1} parent=1 // pred_fallthru
      _
    // Predicated region
    $region14: #{tpu_custom_call.1} parent=1 // pred_check
      _
    $region15: #{tpu_custom_call.1} parent=1 // pred_check_branch
      %38 = sbr.rel (0) target = $region17
    $region16: #{tpu_custom_call.1} parent=1 // pred_region
      %39 = dma.done [#allocation3], 2048
    $region17: #{tpu_custom_call.1} parent=1 // pred_fallthru
      _
    // Predicated region
    $region18: #{tpu_custom_call.1} parent=1 // pred_check
      _
    $region19: #{tpu_custom_call.1} parent=1 // pred_check_branch
      %41 = sbr.rel (0) target = $region21
    $region20: #{tpu_custom_call.1} parent=1 // pred_region
      %42 = dma.done [#allocation6], 16384
    $region21: #{tpu_custom_call.1} parent=1 // pred_fallthru
      _
    %v43 = vld [vmem:[%s2] sm:$0x1]
    %v44 = vld [vmem:[#allocation2] sm:$0xff]
    %v45 = vld [vmem:[#allocation2 + $0x8] sm:$0xff]
    %v46 = vld [vmem:[#allocation5] sm:$0xff]
    %v47 = vld [vmem:[#allocation5 + $0x8] sm:$0xff]
    %v48 = vld [vmem:[#allocation5 + $0x10] sm:$0xff]
    %v49 = vld [vmem:[#allocation5 + $0x18] sm:$0xff]
    %v50 = vld [vmem:[#allocation5 + $0x20] sm:$0xff]
    %v51 = vld [vmem:[#allocation5 + $0x28] sm:$0xff]
    %v52 = vld [vmem:[#allocation5 + $0x30] sm:$0xff]
    %v53 = vld [vmem:[#allocation5 + $0x38] sm:$0xff]
    %v54 = vld [vmem:[#allocation5 + $0x40] sm:$0xff]
    %v55 = vld [vmem:[#allocation5 + $0x48] sm:$0xff]
    %v56 = vld [vmem:[#allocation5 + $0x50] sm:$0xff]
    %v57 = vld [vmem:[#allocation5 + $0x58] sm:$0xff]
    %v58 = vld [vmem:[#allocation5 + $0x60] sm:$0xff]
    %v59 = vld [vmem:[#allocation5 + $0x68] sm:$0xff]
    %v60 = vld [vmem:[#allocation5 + $0x70] sm:$0xff]
    %v61 = vld [vmem:[#allocation5 + $0x78] sm:$0xff]
    %v62 = vld [vmem:[#allocation5 + $0x80] sm:$0xff]
    %v63 = vld [vmem:[#allocation5 + $0x88] sm:$0xff]
    %v64 = vld [vmem:[#allocation5 + $0x90] sm:$0xff]
    %v65 = vld [vmem:[#allocation5 + $0x98] sm:$0xff]
    %v66 = vld [vmem:[#allocation5 + $0xa0] sm:$0xff]
    %v67 = vld [vmem:[#allocation5 + $0xa8] sm:$0xff]
    %v68 = vld [vmem:[#allocation5 + $0xb0] sm:$0xff]
    %v69 = vld [vmem:[#allocation5 + $0xb8] sm:$0xff]
    %v70 = vld [vmem:[#allocation5 + $0xc0] sm:$0xff]
    %v71 = vld [vmem:[#allocation5 + $0xc8] sm:$0xff]
    %v72 = vld [vmem:[#allocation5 + $0xd0] sm:$0xff]
    %v73 = vld [vmem:[#allocation5 + $0xd8] sm:$0xff]
    %v74 = vld [vmem:[#allocation5 + $0xe0] sm:$0xff]
    %v75 = vld [vmem:[#allocation5 + $0xe8] sm:$0xff]
    %v76 = vld [vmem:[#allocation5 + $0xf0] sm:$0xff]
    %v77 = vld [vmem:[#allocation5 + $0xf8] sm:$0xff]
    %s78 = scalar_lea.vmem [#allocation2], 16
    %v79 = vld [vmem:[%s78] sm:$0xff]
    %v80 = vld [vmem:[%s78 + $0x8] sm:$0xff]
    %s81 = scalar_lea.vmem [#allocation5], 256
    %v82 = vld [vmem:[%s81] sm:$0xff]
    %v83 = vld [vmem:[%s81 + $0x8] sm:$0xff]
    %v84 = vld [vmem:[%s81 + $0x10] sm:$0xff]
    %v85 = vld [vmem:[%s81 + $0x18] sm:$0xff]
    %v86 = vld [vmem:[%s81 + $0x20] sm:$0xff]
    %v87 = vld [vmem:[%s81 + $0x28] sm:$0xff]
    %v88 = vld [vmem:[%s81 + $0x30] sm:$0xff]
    %v89 = vld [vmem:[%s81 + $0x38] sm:$0xff]
    %v90 = vld [vmem:[%s81 + $0x40] sm:$0xff]
    %v91 = vld [vmem:[%s81 + $0x48] sm:$0xff]
    %v92 = vld [vmem:[%s81 + $0x50] sm:$0xff]
    %v93 = vld [vmem:[%s81 + $0x58] sm:$0xff]
    %v94 = vld [vmem:[%s81 + $0x60] sm:$0xff]
    %v95 = vld [vmem:[%s81 + $0x68] sm:$0xff]
    %v96 = vld [vmem:[%s81 + $0x70] sm:$0xff]
    %v97 = vld [vmem:[%s81 + $0x78] sm:$0xff]
    %v98 = vld [vmem:[%s81 + $0x80] sm:$0xff]
    %v99 = vld [vmem:[%s81 + $0x88] sm:$0xff]
    %v100 = vld [vmem:[%s81 + $0x90] sm:$0xff]
    %v101 = vld [vmem:[%s81 + $0x98] sm:$0xff]
    %v102 = vld [vmem:[%s81 + $0xa0] sm:$0xff]
    %v103 = vld [vmem:[%s81 + $0xa8] sm:$0xff]
    %v104 = vld [vmem:[%s81 + $0xb0] sm:$0xff]
    %v105 = vld [vmem:[%s81 + $0xb8] sm:$0xff]
    %v106 = vld [vmem:[%s81 + $0xc0] sm:$0xff]
    %v107 = vld [vmem:[%s81 + $0xc8] sm:$0xff]
    %v108 = vld [vmem:[%s81 + $0xd0] sm:$0xff]
    %v109 = vld [vmem:[%s81 + $0xd8] sm:$0xff]
    %v110 = vld [vmem:[%s81 + $0xe0] sm:$0xff]
    %v111 = vld [vmem:[%s81 + $0xe8] sm:$0xff]
    %v112 = vld [vmem:[%s81 + $0xf0] sm:$0xff]
    %v113 = vld [vmem:[%s81 + $0xf8] sm:$0xff]
    %114 = vmatprep.subr.mxu0 0.0
    %115 = vmatpush1.msra.mxu0 %v82
    %116 = vmatprep.subr.mxu0 0.0
    %117 = vmatpush1.msra.mxu0 %v83
    %118 = vmatprep.subr.mxu0 0.0
    %119 = vmatpush1.msra.mxu0 %v84
    %120 = vmatprep.subr.mxu0 0.0
    %121 = vmatpush1.msra.mxu0 %v85
    %122 = vmatprep.subr.mxu0 0.0
    %123 = vmatpush1.msra.mxu0 %v86
    %124 = vmatprep.subr.mxu0 0.0
    %125 = vmatpush1.msra.mxu0 %v87
    %126 = vmatprep.subr.mxu0 0.0
    %127 = vmatpush1.msra.mxu0 %v88
    %128 = vmatprep.subr.mxu0 0.0
    %129 = vmatpush1.msra.mxu0 %v89
    %130 = vmatprep.subr.mxu0 0.0
    %131 = vmatpush1.msra.mxu0 %v90
    %132 = vmatprep.subr.mxu0 0.0
    %133 = vmatpush1.msra.mxu0 %v91
    %134 = vmatprep.subr.mxu0 0.0
    %135 = vmatpush1.msra.mxu0 %v92
    %136 = vmatprep.subr.mxu0 0.0
    %137 = vmatpush1.msra.mxu0 %v93
    %138 = vmatprep.subr.mxu0 0.0
    %139 = vmatpush1.msra.mxu0 %v94
    %140 = vmatprep.subr.mxu0 0.0
    %141 = vmatpush1.msra.mxu0 %v95
    %142 = vmatprep.subr.mxu0 0.0
    %143 = vmatpush1.msra.mxu0 %v96
    %144 = vmatprep.subr.mxu0 0.0
    %145 = vmatpush1.msra.mxu0 %v97
    %146 = vmatprep.subr.mxu0 0.0
    %147 = vmatpush1.msra.mxu0 %v98
    %148 = vmatprep.subr.mxu0 0.0
    %149 = vmatpush1.msra.mxu0 %v99
    %150 = vmatprep.subr.mxu0 0.0
    %151 = vmatpush1.msra.mxu0 %v100
    %152 = vmatprep.subr.mxu0 0.0
    %153 = vmatpush1.msra.mxu0 %v101
    %154 = vmatprep.subr.mxu0 0.0
    %155 = vmatpush1.msra.mxu0 %v102
    %156 = vmatprep.subr.mxu0 0.0
    %157 = vmatpush1.msra.mxu0 %v103
    %158 = vmatprep.subr.mxu0 0.0
    %159 = vmatpush1.msra.mxu0 %v104
    %160 = vmatprep.subr.mxu0 0.0
    %161 = vmatpush1.msra.mxu0 %v105
    %162 = vmatprep.subr.mxu0 0.0
    %163 = vmatpush1.msra.mxu0 %v106
    %164 = vmatprep.subr.mxu0 0.0
    %165 = vmatpush1.msra.mxu0 %v107
    %166 = vmatprep.subr.mxu0 0.0
    %167 = vmatpush1.msra.mxu0 %v108
    %168 = vmatprep.subr.mxu0 0.0
    %169 = vmatpush1.msra.mxu0 %v109
    %170 = vmatprep.subr.mxu0 0.0
    %171 = vmatpush1.msra.mxu0 %v110
    %172 = vmatprep.subr.mxu0 0.0
    %173 = vmatpush1.msra.mxu0 %v111
    %174 = vmatprep.subr.mxu0 0.0
    %175 = vmatpush1.msra.mxu0 %v112
    %176 = vmatprep.subr.mxu0 0.0
    %177 = vmatpush1.msra.mxu0 %v113
    %178 = vmatprep.mubr.f32.mxu0 %v80
    %179 = vmatmul.mubr.f32.gmra.mrb[0].mxu0 %v79
    %v180 = vpop.f32.mrb[0].mxu0
    %v181 = vadd.f32 0.0, %v180
    %v182 = vpop.f32.mrb[0].mxu0
    %183 = vdwg.mxu0
    %184 = vmatprep.subr.mxu0 0.0
    %185 = vmatpush1.msra.mxu0 %v46
    %186 = vmatprep.subr.mxu0 0.0
    %187 = vmatpush1.msra.mxu0 %v47
    %188 = vmatprep.subr.mxu0 0.0
    %189 = vmatpush1.msra.mxu0 %v48
    %190 = vmatprep.subr.mxu0 0.0
    %191 = vmatpush1.msra.mxu0 %v49
    %192 = vmatprep.subr.mxu0 0.0
    %193 = vmatpush1.msra.mxu0 %v50
    %194 = vmatprep.subr.mxu0 0.0
    %195 = vmatpush1.msra.mxu0 %v51
    %196 = vmatprep.subr.mxu0 0.0
    %197 = vmatpush1.msra.mxu0 %v52
    %198 = vmatprep.subr.mxu0 0.0
    %199 = vmatpush1.msra.mxu0 %v53
    %200 = vmatprep.subr.mxu0 0.0
    %201 = vmatpush1.msra.mxu0 %v54
    %202 = vmatprep.subr.mxu0 0.0
    %203 = vmatpush1.msra.mxu0 %v55
    %204 = vmatprep.subr.mxu0 0.0
    %205 = vmatpush1.msra.mxu0 %v56
    %206 = vmatprep.subr.mxu0 0.0
    %207 = vmatpush1.msra.mxu0 %v57
    %208 = vmatprep.subr.mxu0 0.0
    %209 = vmatpush1.msra.mxu0 %v58
    %210 = vmatprep.subr.mxu0 0.0
    %211 = vmatpush1.msra.mxu0 %v59
    %212 = vmatprep.subr.mxu0 0.0
    %213 = vmatpush1.msra.mxu0 %v60
    %214 = vmatprep.subr.mxu0 0.0
    %215 = vmatpush1.msra.mxu0 %v61
    %216 = vmatprep.subr.mxu0 0.0
    %217 = vmatpush1.msra.mxu0 %v62
    %218 = vmatprep.subr.mxu0 0.0
    %219 = vmatpush1.msra.mxu0 %v63
    %220 = vmatprep.subr.mxu0 0.0
    %221 = vmatpush1.msra.mxu0 %v64
    %222 = vmatprep.subr.mxu0 0.0
    %223 = vmatpush1.msra.mxu0 %v65
    %224 = vmatprep.subr.mxu0 0.0
    %225 = vmatpush1.msra.mxu0 %v66
    %226 = vmatprep.subr.mxu0 0.0
    %227 = vmatpush1.msra.mxu0 %v67
    %228 = vmatprep.subr.mxu0 0.0
    %229 = vmatpush1.msra.mxu0 %v68
    %230 = vmatprep.subr.mxu0 0.0
    %231 = vmatpush1.msra.mxu0 %v69
    %232 = vmatprep.subr.mxu0 0.0
    %233 = vmatpush1.msra.mxu0 %v70
    %234 = vmatprep.subr.mxu0 0.0
    %235 = vmatpush1.msra.mxu0 %v71
    %236 = vmatprep.subr.mxu0 0.0
    %237 = vmatpush1.msra.mxu0 %v72
    %238 = vmatprep.subr.mxu0 0.0
    %239 = vmatpush1.msra.mxu0 %v73
    %240 = vmatprep.subr.mxu0 0.0
    %241 = vmatpush1.msra.mxu0 %v74
    %242 = vmatprep.subr.mxu0 0.0
    %243 = vmatpush1.msra.mxu0 %v75
    %244 = vmatprep.subr.mxu0 0.0
    %245 = vmatpush1.msra.mxu0 %v76
    %246 = vmatprep.subr.mxu0 0.0
    %247 = vmatpush1.msra.mxu0 %v77
    %248 = vmatprep.mubr.f32.mxu0 %v45
    %249 = vmatmul.mubr.f32.gmra.mrb[0].mxu0 %v44
    %v250 = vpop.f32.mrb[0].mxu0
    %v251 = vadd.f32 %v181, %v250
    %v252 = vpop.f32.mrb[0].mxu0
    %253 = vdwg.mxu0
    %s254 = scalar_lea.vmem [#allocation2], 32
    %v255 = vld [vmem:[%s254] sm:$0xff]
    %v256 = vld [vmem:[%s254 + $0x8] sm:$0xff]
    %s257 = scalar_lea.vmem [#allocation5], 512
    %v258 = vld [vmem:[%s257] sm:$0xff]
    %v259 = vld [vmem:[%s257 + $0x8] sm:$0xff]
    %v260 = vld [vmem:[%s257 + $0x10] sm:$0xff]
    %v261 = vld [vmem:[%s257 + $0x18] sm:$0xff]
    %v262 = vld [vmem:[%s257 + $0x20] sm:$0xff]
    %v263 = vld [vmem:[%s257 + $0x28] sm:$0xff]
    %v264 = vld [vmem:[%s257 + $0x30] sm:$0xff]
    %v265 = vld [vmem:[%s257 + $0x38] sm:$0xff]
    %v266 = vld [vmem:[%s257 + $0x40] sm:$0xff]
    %v267 = vld [vmem:[%s257 + $0x48] sm:$0xff]
    %v268 = vld [vmem:[%s257 + $0x50] sm:$0xff]
    %v269 = vld [vmem:[%s257 + $0x58] sm:$0xff]
    %v270 = vld [vmem:[%s257 + $0x60] sm:$0xff]
    %v271 = vld [vmem:[%s257 + $0x68] sm:$0xff]
    %v272 = vld [vmem:[%s257 + $0x70] sm:$0xff]
    %v273 = vld [vmem:[%s257 + $0x78] sm:$0xff]
    %v274 = vld [vmem:[%s257 + $0x80] sm:$0xff]
    %v275 = vld [vmem:[%s257 + $0x88] sm:$0xff]
    %v276 = vld [vmem:[%s257 + $0x90] sm:$0xff]
    %v277 = vld [vmem:[%s257 + $0x98] sm:$0xff]
    %v278 = vld [vmem:[%s257 + $0xa0] sm:$0xff]
    %v279 = vld [vmem:[%s257 + $0xa8] sm:$0xff]
    %v280 = vld [vmem:[%s257 + $0xb0] sm:$0xff]
    %v281 = vld [vmem:[%s257 + $0xb8] sm:$0xff]
    %v282 = vld [vmem:[%s257 + $0xc0] sm:$0xff]
    %v283 = vld [vmem:[%s257 + $0xc8] sm:$0xff]
    %v284 = vld [vmem:[%s257 + $0xd0] sm:$0xff]
    %v285 = vld [vmem:[%s257 + $0xd8] sm:$0xff]
    %v286 = vld [vmem:[%s257 + $0xe0] sm:$0xff]
    %v287 = vld [vmem:[%s257 + $0xe8] sm:$0xff]
    %v288 = vld [vmem:[%s257 + $0xf0] sm:$0xff]
    %v289 = vld [vmem:[%s257 + $0xf8] sm:$0xff]
    %290 = vmatprep.subr.mxu0 0.0
    %291 = vmatpush1.msra.mxu0 %v258
    %292 = vmatprep.subr.mxu0 0.0
    %293 = vmatpush1.msra.mxu0 %v259
    %294 = vmatprep.subr.mxu0 0.0
    %295 = vmatpush1.msra.mxu0 %v260
    %296 = vmatprep.subr.mxu0 0.0
    %297 = vmatpush1.msra.mxu0 %v261
    %298 = vmatprep.subr.mxu0 0.0
    %299 = vmatpush1.msra.mxu0 %v262
    %300 = vmatprep.subr.mxu0 0.0
    %301 = vmatpush1.msra.mxu0 %v263
    %302 = vmatprep.subr.mxu0 0.0
    %303 = vmatpush1.msra.mxu0 %v264
    %304 = vmatprep.subr.mxu0 0.0
    %305 = vmatpush1.msra.mxu0 %v265
    %306 = vmatprep.subr.mxu0 0.0
    %307 = vmatpush1.msra.mxu0 %v266
    %308 = vmatprep.subr.mxu0 0.0
    %309 = vmatpush1.msra.mxu0 %v267
    %310 = vmatprep.subr.mxu0 0.0
    %311 = vmatpush1.msra.mxu0 %v268
    %312 = vmatprep.subr.mxu0 0.0
    %313 = vmatpush1.msra.mxu0 %v269
    %314 = vmatprep.subr.mxu0 0.0
    %315 = vmatpush1.msra.mxu0 %v270
    %316 = vmatprep.subr.mxu0 0.0
    %317 = vmatpush1.msra.mxu0 %v271
    %318 = vmatprep.subr.mxu0 0.0
    %319 = vmatpush1.msra.mxu0 %v272
    %320 = vmatprep.subr.mxu0 0.0
    %321 = vmatpush1.msra.mxu0 %v273
    %322 = vmatprep.subr.mxu0 0.0
    %323 = vmatpush1.msra.mxu0 %v274
    %324 = vmatprep.subr.mxu0 0.0
    %325 = vmatpush1.msra.mxu0 %v275
    %326 = vmatprep.subr.mxu0 0.0
    %327 = vmatpush1.msra.mxu0 %v276
    %328 = vmatprep.subr.mxu0 0.0
    %329 = vmatpush1.msra.mxu0 %v277
    %330 = vmatprep.subr.mxu0 0.0
    %331 = vmatpush1.msra.mxu0 %v278
    %332 = vmatprep.subr.mxu0 0.0
    %333 = vmatpush1.msra.mxu0 %v279
    %334 = vmatprep.subr.mxu0 0.0
    %335 = vmatpush1.msra.mxu0 %v280
    %336 = vmatprep.subr.mxu0 0.0
    %337 = vmatpush1.msra.mxu0 %v281
    %338 = vmatprep.subr.mxu0 0.0
    %339 = vmatpush1.msra.mxu0 %v282
    %340 = vmatprep.subr.mxu0 0.0
    %341 = vmatpush1.msra.mxu0 %v283
    %342 = vmatprep.subr.mxu0 0.0
    %343 = vmatpush1.msra.mxu0 %v284
    %344 = vmatprep.subr.mxu0 0.0
    %345 = vmatpush1.msra.mxu0 %v285
    %346 = vmatprep.subr.mxu0 0.0
    %347 = vmatpush1.msra.mxu0 %v286
    %348 = vmatprep.subr.mxu0 0.0
    %349 = vmatpush1.msra.mxu0 %v287
    %350 = vmatprep.subr.mxu0 0.0
    %351 = vmatpush1.msra.mxu0 %v288
    %352 = vmatprep.subr.mxu0 0.0
    %353 = vmatpush1.msra.mxu0 %v289
    %354 = vmatprep.mubr.f32.mxu0 %v256
    %355 = vmatmul.mubr.f32.gmra.mrb[0].mxu0 %v255
    %v356 = vpop.f32.mrb[0].mxu0
    %v357 = vadd.f32 0.0, %v356
    %v358 = vpop.f32.mrb[0].mxu0
    %359 = vdwg.mxu0
    %v360 = vadd.f32 %v251, %v357
    %s361 = scalar_lea.vmem [#allocation2], 48
    %v362 = vld [vmem:[%s361] sm:$0xff]
    %v363 = vld [vmem:[%s361 + $0x8] sm:$0xff]
    %s364 = scalar_lea.vmem [#allocation5], 768
    %v365 = vld [vmem:[%s364] sm:$0xff]
    %v366 = vld [vmem:[%s364 + $0x8] sm:$0xff]
    %v367 = vld [vmem:[%s364 + $0x10] sm:$0xff]
    %v368 = vld [vmem:[%s364 + $0x18] sm:$0xff]
    %v369 = vld [vmem:[%s364 + $0x20] sm:$0xff]
    %v370 = vld [vmem:[%s364 + $0x28] sm:$0xff]
    %v371 = vld [vmem:[%s364 + $0x30] sm:$0xff]
    %v372 = vld [vmem:[%s364 + $0x38] sm:$0xff]
    %v373 = vld [vmem:[%s364 + $0x40] sm:$0xff]
    %v374 = vld [vmem:[%s364 + $0x48] sm:$0xff]
    %v375 = vld [vmem:[%s364 + $0x50] sm:$0xff]
    %v376 = vld [vmem:[%s364 + $0x58] sm:$0xff]
    %v377 = vld [vmem:[%s364 + $0x60] sm:$0xff]
    %v378 = vld [vmem:[%s364 + $0x68] sm:$0xff]
    %v379 = vld [vmem:[%s364 + $0x70] sm:$0xff]
    %v380 = vld [vmem:[%s364 + $0x78] sm:$0xff]
    %v381 = vld [vmem:[%s364 + $0x80] sm:$0xff]
    %v382 = vld [vmem:[%s364 + $0x88] sm:$0xff]
    %v383 = vld [vmem:[%s364 + $0x90] sm:$0xff]
    %v384 = vld [vmem:[%s364 + $0x98] sm:$0xff]
    %v385 = vld [vmem:[%s364 + $0xa0] sm:$0xff]
    %v386 = vld [vmem:[%s364 + $0xa8] sm:$0xff]
    %v387 = vld [vmem:[%s364 + $0xb0] sm:$0xff]
    %v388 = vld [vmem:[%s364 + $0xb8] sm:$0xff]
    %v389 = vld [vmem:[%s364 + $0xc0] sm:$0xff]
    %v390 = vld [vmem:[%s364 + $0xc8] sm:$0xff]
    %v391 = vld [vmem:[%s364 + $0xd0] sm:$0xff]
    %v392 = vld [vmem:[%s364 + $0xd8] sm:$0xff]
    %v393 = vld [vmem:[%s364 + $0xe0] sm:$0xff]
    %v394 = vld [vmem:[%s364 + $0xe8] sm:$0xff]
    %v395 = vld [vmem:[%s364 + $0xf0] sm:$0xff]
    %v396 = vld [vmem:[%s364 + $0xf8] sm:$0xff]
    %397 = vmatprep.subr.mxu0 0.0
    %398 = vmatpush1.msra.mxu0 %v365
    %399 = vmatprep.subr.mxu0 0.0
    %400 = vmatpush1.msra.mxu0 %v366
    %401 = vmatprep.subr.mxu0 0.0
    %402 = vmatpush1.msra.mxu0 %v367
    %403 = vmatprep.subr.mxu0 0.0
    %404 = vmatpush1.msra.mxu0 %v368
    %405 = vmatprep.subr.mxu0 0.0
    %406 = vmatpush1.msra.mxu0 %v369
    %407 = vmatprep.subr.mxu0 0.0
    %408 = vmatpush1.msra.mxu0 %v370
    %409 = vmatprep.subr.mxu0 0.0
    %410 = vmatpush1.msra.mxu0 %v371
    %411 = vmatprep.subr.mxu0 0.0
    %412 = vmatpush1.msra.mxu0 %v372
    %413 = vmatprep.subr.mxu0 0.0
    %414 = vmatpush1.msra.mxu0 %v373
    %415 = vmatprep.subr.mxu0 0.0
    %416 = vmatpush1.msra.mxu0 %v374
    %417 = vmatprep.subr.mxu0 0.0
    %418 = vmatpush1.msra.mxu0 %v375
    %419 = vmatprep.subr.mxu0 0.0
    %420 = vmatpush1.msra.mxu0 %v376
    %421 = vmatprep.subr.mxu0 0.0
    %422 = vmatpush1.msra.mxu0 %v377
    %423 = vmatprep.subr.mxu0 0.0
    %424 = vmatpush1.msra.mxu0 %v378
    %425 = vmatprep.subr.mxu0 0.0
    %426 = vmatpush1.msra.mxu0 %v379
    %427 = vmatprep.subr.mxu0 0.0
    %428 = vmatpush1.msra.mxu0 %v380
    %429 = vmatprep.subr.mxu0 0.0
    %430 = vmatpush1.msra.mxu0 %v381
    %431 = vmatprep.subr.mxu0 0.0
    %432 = vmatpush1.msra.mxu0 %v382
    %433 = vmatprep.subr.mxu0 0.0
    %434 = vmatpush1.msra.mxu0 %v383
    %435 = vmatprep.subr.mxu0 0.0
    %436 = vmatpush1.msra.mxu0 %v384
    %437 = vmatprep.subr.mxu0 0.0
    %438 = vmatpush1.msra.mxu0 %v385
    %439 = vmatprep.subr.mxu0 0.0
    %440 = vmatpush1.msra.mxu0 %v386
    %441 = vmatprep.subr.mxu0 0.0
    %442 = vmatpush1.msra.mxu0 %v387
    %443 = vmatprep.subr.mxu0 0.0
    %444 = vmatpush1.msra.mxu0 %v388
    %445 = vmatprep.subr.mxu0 0.0
    %446 = vmatpush1.msra.mxu0 %v389
    %447 = vmatprep.subr.mxu0 0.0
    %448 = vmatpush1.msra.mxu0 %v390
    %449 = vmatprep.subr.mxu0 0.0
    %450 = vmatpush1.msra.mxu0 %v391
    %451 = vmatprep.subr.mxu0 0.0
    %452 = vmatpush1.msra.mxu0 %v392
    %453 = vmatprep.subr.mxu0 0.0
    %454 = vmatpush1.msra.mxu0 %v393
    %455 = vmatprep.subr.mxu0 0.0
    %456 = vmatpush1.msra.mxu0 %v394
    %457 = vmatprep.subr.mxu0 0.0
    %458 = vmatpush1.msra.mxu0 %v395
    %459 = vmatprep.subr.mxu0 0.0
    %460 = vmatpush1.msra.mxu0 %v396
    %461 = vmatprep.mubr.f32.mxu0 %v363
    %462 = vmatmul.mubr.f32.gmra.mrb[0].mxu0 %v362
    %v463 = vpop.f32.mrb[0].mxu0
    %v464 = vadd.f32 0.0, %v463
    %v465 = vpop.f32.mrb[0].mxu0
    %466 = vdwg.mxu0
    %v467 = vadd.f32 %v360, %v464
    %v469 = vlaneseq
    %v470 = vshrl.u32 %v469, 7
    %v471 = vsub.s32 0, %v470
    %v472 = vrot.slane %v43, %v471
    %v474 = vadd.f32 %v467, %v472
    %v475 = vmax.f32 %v474, 0.0
    %vm476 = vcmp.ne.f32.partialorder %v474, %v474
    %v477 = vadd.f32 %v474, 0.0
    %v478 = vand.u32 2147483647, %v474
    %v479 = vsub.f32 0.0, %v478
    %v480 = vmul.f32 %v479, 1.442695
    %v481 = vpow.pop %v480
    %v482 = vadd.f32 %v481, 1.0
    %v483 = vlog2.pop %v482
    %v484 = vmul.f32 %v483, 0.6931472
    %v485 = vmul.f32 -0.5, %v481
    %v486 = vadd.f32 %v485, 1.0
    %v487 = vmul.f32 %v486, %v481
    %v488 = vand.u32 2147483647, %v481
    %vm489 = vcmp.lt.f32.partialorder %v488, 0.0004427343
    %v490 = vsel %vm489, %v487, %v484
    %v491 = vadd.f32 %v475, %v490
    %v492 = vsel %vm476, %v477, %v491
    %493 = vst [vmem:[#allocation7] sm:$0xff] %v492
    %s494 = scalar_lea.vmem [#allocation2], 64
    %v495 = vld [vmem:[%s494] sm:$0xff]
    %v496 = vld [vmem:[%s494 + $0x8] sm:$0xff]
    %v497 = vld [vmem:[#allocation5] sm:$0xff]
    %v498 = vld [vmem:[#allocation5 + $0x8] sm:$0xff]
    %v499 = vld [vmem:[#allocation5 + $0x10] sm:$0xff]
    %v500 = vld [vmem:[#allocation5 + $0x18] sm:$0xff]
    %v501 = vld [vmem:[#allocation5 + $0x20] sm:$0xff]
    %v502 = vld [vmem:[#allocation5 + $0x28] sm:$0xff]
    %v503 = vld [vmem:[#allocation5 + $0x30] sm:$0xff]
    %v504 = vld [vmem:[#allocation5 + $0x38] sm:$0xff]
    %v505 = vld [vmem:[#allocation5 + $0x40] sm:$0xff]
    %v506 = vld [vmem:[#allocation5 + $0x48] sm:$0xff]
    %v507 = vld [vmem:[#allocation5 + $0x50] sm:$0xff]
    %v508 = vld [vmem:[#allocation5 + $0x58] sm:$0xff]
    %v509 = vld [vmem:[#allocation5 + $0x60] sm:$0xff]
    %v510 = vld [vmem:[#allocation5 + $0x68] sm:$0xff]
    %v511 = vld [vmem:[#allocation5 + $0x70] sm:$0xff]
    %v512 = vld [vmem:[#allocation5 + $0x78] sm:$0xff]
    %v513 = vld [vmem:[#allocation5 + $0x80] sm:$0xff]
    %v514 = vld [vmem:[#allocation5 + $0x88] sm:$0xff]
    %v515 = vld [vmem:[#allocation5 + $0x90] sm:$0xff]
    %v516 = vld [vmem:[#allocation5 + $0x98] sm:$0xff]
    %v517 = vld [vmem:[#allocation5 + $0xa0] sm:$0xff]
    %v518 = vld [vmem:[#allocation5 + $0xa8] sm:$0xff]
    %v519 = vld [vmem:[#allocation5 + $0xb0] sm:$0xff]
    %v520 = vld [vmem:[#allocation5 + $0xb8] sm:$0xff]
    %v521 = vld [vmem:[#allocation5 + $0xc0] sm:$0xff]
    %v522 = vld [vmem:[#allocation5 + $0xc8] sm:$0xff]
    %v523 = vld [vmem:[#allocation5 + $0xd0] sm:$0xff]
    %v524 = vld [vmem:[#allocation5 + $0xd8] sm:$0xff]
    %v525 = vld [vmem:[#allocation5 + $0xe0] sm:$0xff]
    %v526 = vld [vmem:[#allocation5 + $0xe8] sm:$0xff]
    %v527 = vld [vmem:[#allocation5 + $0xf0] sm:$0xff]
    %v528 = vld [vmem:[#allocation5 + $0xf8] sm:$0xff]
    %s529 = scalar_lea.vmem [#allocation2], 80
    %v530 = vld [vmem:[%s529] sm:$0xff]
    %v531 = vld [vmem:[%s529 + $0x8] sm:$0xff]
    %v532 = vld [vmem:[%s81] sm:$0xff]
    %v533 = vld [vmem:[%s81 + $0x8] sm:$0xff]
    %v534 = vld [vmem:[%s81 + $0x10] sm:$0xff]
    %v535 = vld [vmem:[%s81 + $0x18] sm:$0xff]
    %v536 = vld [vmem:[%s81 + $0x20] sm:$0xff]
    %v537 = vld [vmem:[%s81 + $0x28] sm:$0xff]
    %v538 = vld [vmem:[%s81 + $0x30] sm:$0xff]
    %v539 = vld [vmem:[%s81 + $0x38] sm:$0xff]
    %v540 = vld [vmem:[%s81 + $0x40] sm:$0xff]
    %v541 = vld [vmem:[%s81 + $0x48] sm:$0xff]
    %v542 = vld [vmem:[%s81 + $0x50] sm:$0xff]
    %v543 = vld [vmem:[%s81 + $0x58] sm:$0xff]
    %v544 = vld [vmem:[%s81 + $0x60] sm:$0xff]
    %v545 = vld [vmem:[%s81 + $0x68] sm:$0xff]
    %v546 = vld [vmem:[%s81 + $0x70] sm:$0xff]
    %v547 = vld [vmem:[%s81 + $0x78] sm:$0xff]
    %v548 = vld [vmem:[%s81 + $0x80] sm:$0xff]
    %v549 = vld [vmem:[%s81 + $0x88] sm:$0xff]
    %v550 = vld [vmem:[%s81 + $0x90] sm:$0xff]
    %v551 = vld [vmem:[%s81 + $0x98] sm:$0xff]
    %v552 = vld [vmem:[%s81 + $0xa0] sm:$0xff]
    %v553 = vld [vmem:[%s81 + $0xa8] sm:$0xff]
    %v554 = vld [vmem:[%s81 + $0xb0] sm:$0xff]
    %v555 = vld [vmem:[%s81 + $0xb8] sm:$0xff]
    %v556 = vld [vmem:[%s81 + $0xc0] sm:$0xff]
    %v557 = vld [vmem:[%s81 + $0xc8] sm:$0xff]
    %v558 = vld [vmem:[%s81 + $0xd0] sm:$0xff]
    %v559 = vld [vmem:[%s81 + $0xd8] sm:$0xff]
    %v560 = vld [vmem:[%s81 + $0xe0] sm:$0xff]
    %v561 = vld [vmem:[%s81 + $0xe8] sm:$0xff]
    %v562 = vld [vmem:[%s81 + $0xf0] sm:$0xff]
    %v563 = vld [vmem:[%s81 + $0xf8] sm:$0xff]
    %564 = vmatprep.subr.mxu0 0.0
    %565 = vmatpush1.msra.mxu0 %v532
    %566 = vmatprep.subr.mxu0 0.0
    %567 = vmatpush1.msra.mxu0 %v533
    %568 = vmatprep.subr.mxu0 0.0
    %569 = vmatpush1.msra.mxu0 %v534
    %570 = vmatprep.subr.mxu0 0.0
    %571 = vmatpush1.msra.mxu0 %v535
    %572 = vmatprep.subr.mxu0 0.0
    %573 = vmatpush1.msra.mxu0 %v536
    %574 = vmatprep.subr.mxu0 0.0
    %575 = vmatpush1.msra.mxu0 %v537
    %576 = vmatprep.subr.mxu0 0.0
    %577 = vmatpush1.msra.mxu0 %v538
    %578 = vmatprep.subr.mxu0 0.0
    %579 = vmatpush1.msra.mxu0 %v539
    %580 = vmatprep.subr.mxu0 0.0
    %581 = vmatpush1.msra.mxu0 %v540
    %582 = vmatprep.subr.mxu0 0.0
    %583 = vmatpush1.msra.mxu0 %v541
    %584 = vmatprep.subr.mxu0 0.0
    %585 = vmatpush1.msra.mxu0 %v542
    %586 = vmatprep.subr.mxu0 0.0
    %587 = vmatpush1.msra.mxu0 %v543
    %588 = vmatprep.subr.mxu0 0.0
    %589 = vmatpush1.msra.mxu0 %v544
    %590 = vmatprep.subr.mxu0 0.0
    %591 = vmatpush1.msra.mxu0 %v545
    %592 = vmatprep.subr.mxu0 0.0
    %593 = vmatpush1.msra.mxu0 %v546
    %594 = vmatprep.subr.mxu0 0.0
    %595 = vmatpush1.msra.mxu0 %v547
    %596 = vmatprep.subr.mxu0 0.0
    %597 = vmatpush1.msra.mxu0 %v548
    %598 = vmatprep.subr.mxu0 0.0
    %599 = vmatpush1.msra.mxu0 %v549
    %600 = vmatprep.subr.mxu0 0.0
    %601 = vmatpush1.msra.mxu0 %v550
    %602 = vmatprep.subr.mxu0 0.0
    %603 = vmatpush1.msra.mxu0 %v551
    %604 = vmatprep.subr.mxu0 0.0
    %605 = vmatpush1.msra.mxu0 %v552
    %606 = vmatprep.subr.mxu0 0.0
    %607 = vmatpush1.msra.mxu0 %v553
    %608 = vmatprep.subr.mxu0 0.0
    %609 = vmatpush1.msra.mxu0 %v554
    %610 = vmatprep.subr.mxu0 0.0
    %611 = vmatpush1.msra.mxu0 %v555
    %612 = vmatprep.subr.mxu0 0.0
    %613 = vmatpush1.msra.mxu0 %v556
    %614 = vmatprep.subr.mxu0 0.0
    %615 = vmatpush1.msra.mxu0 %v557
    %616 = vmatprep.subr.mxu0 0.0
    %617 = vmatpush1.msra.mxu0 %v558
    %618 = vmatprep.subr.mxu0 0.0
    %619 = vmatpush1.msra.mxu0 %v559
    %620 = vmatprep.subr.mxu0 0.0
    %621 = vmatpush1.msra.mxu0 %v560
    %622 = vmatprep.subr.mxu0 0.0
    %623 = vmatpush1.msra.mxu0 %v561
    %624 = vmatprep.subr.mxu0 0.0
    %625 = vmatpush1.msra.mxu0 %v562
    %626 = vmatprep.subr.mxu0 0.0
    %627 = vmatpush1.msra.mxu0 %v563
    %628 = vmatprep.mubr.f32.mxu0 %v531
    %629 = vmatmul.mubr.f32.gmra.mrb[0].mxu0 %v530
    %v630 = vpop.f32.mrb[0].mxu0
    %v631 = vadd.f32 0.0, %v630
    %v632 = vpop.f32.mrb[0].mxu0
    %633 = vdwg.mxu0
    %634 = vmatprep.subr.mxu0 0.0
    %635 = vmatpush1.msra.mxu0 %v497
    %636 = vmatprep.subr.mxu0 0.0
    %637 = vmatpush1.msra.mxu0 %v498
    %638 = vmatprep.subr.mxu0 0.0
    %639 = vmatpush1.msra.mxu0 %v499
    %640 = vmatprep.subr.mxu0 0.0
    %641 = vmatpush1.msra.mxu0 %v500
    %642 = vmatprep.subr.mxu0 0.0
    %643 = vmatpush1.msra.mxu0 %v501
    %644 = vmatprep.subr.mxu0 0.0
    %645 = vmatpush1.msra.mxu0 %v502
    %646 = vmatprep.subr.mxu0 0.0
    %647 = vmatpush1.msra.mxu0 %v503
    %648 = vmatprep.subr.mxu0 0.0
    %649 = vmatpush1.msra.mxu0 %v504
    %650 = vmatprep.subr.mxu0 0.0
    %651 = vmatpush1.msra.mxu0 %v505
    %652 = vmatprep.subr.mxu0 0.0
    %653 = vmatpush1.msra.mxu0 %v506
    %654 = vmatprep.subr.mxu0 0.0
    %655 = vmatpush1.msra.mxu0 %v507
    %656 = vmatprep.subr.mxu0 0.0
    %657 = vmatpush1.msra.mxu0 %v508
    %658 = vmatprep.subr.mxu0 0.0
    %659 = vmatpush1.msra.mxu0 %v509
    %660 = vmatprep.subr.mxu0 0.0
    %661 = vmatpush1.msra.mxu0 %v510
    %662 = vmatprep.subr.mxu0 0.0
    %663 = vmatpush1.msra.mxu0 %v511
    %664 = vmatprep.subr.mxu0 0.0
    %665 = vmatpush1.msra.mxu0 %v512
    %666 = vmatprep.subr.mxu0 0.0
    %667 = vmatpush1.msra.mxu0 %v513
    %668 = vmatprep.subr.mxu0 0.0
    %669 = vmatpush1.msra.mxu0 %v514
    %670 = vmatprep.subr.mxu0 0.0
    %671 = vmatpush1.msra.mxu0 %v515
    %672 = vmatprep.subr.mxu0 0.0
    %673 = vmatpush1.msra.mxu0 %v516
    %674 = vmatprep.subr.mxu0 0.0
    %675 = vmatpush1.msra.mxu0 %v517
    %676 = vmatprep.subr.mxu0 0.0
    %677 = vmatpush1.msra.mxu0 %v518
    %678 = vmatprep.subr.mxu0 0.0
    %679 = vmatpush1.msra.mxu0 %v519
    %680 = vmatprep.subr.mxu0 0.0
    %681 = vmatpush1.msra.mxu0 %v520
    %682 = vmatprep.subr.mxu0 0.0
    %683 = vmatpush1.msra.mxu0 %v521
    %684 = vmatprep.subr.mxu0 0.0
    %685 = vmatpush1.msra.mxu0 %v522
    %686 = vmatprep.subr.mxu0 0.0
    %687 = vmatpush1.msra.mxu0 %v523
    %688 = vmatprep.subr.mxu0 0.0
    %689 = vmatpush1.msra.mxu0 %v524
    %690 = vmatprep.subr.mxu0 0.0
    %691 = vmatpush1.msra.mxu0 %v525
    %692 = vmatprep.subr.mxu0 0.0
    %693 = vmatpush1.msra.mxu0 %v526
    %694 = vmatprep.subr.mxu0 0.0
    %695 = vmatpush1.msra.mxu0 %v527
    %696 = vmatprep.subr.mxu0 0.0
    %697 = vmatpush1.msra.mxu0 %v528
    %698 = vmatprep.mubr.f32.mxu0 %v496
    %699 = vmatmul.mubr.f32.gmra.mrb[0].mxu0 %v495
    %v700 = vpop.f32.mrb[0].mxu0
    %v701 = vadd.f32 %v631, %v700
    %v702 = vpop.f32.mrb[0].mxu0
    %703 = vdwg.mxu0
    %s704 = scalar_lea.vmem [#allocation2], 96
    %v705 = vld [vmem:[%s704] sm:$0xff]
    %v706 = vld [vmem:[%s704 + $0x8] sm:$0xff]
    %v707 = vld [vmem:[%s257] sm:$0xff]
    %v708 = vld [vmem:[%s257 + $0x8] sm:$0xff]
    %v709 = vld [vmem:[%s257 + $0x10] sm:$0xff]
    %v710 = vld [vmem:[%s257 + $0x18] sm:$0xff]
    %v711 = vld [vmem:[%s257 + $0x20] sm:$0xff]
    %v712 = vld [vmem:[%s257 + $0x28] sm:$0xff]
    %v713 = vld [vmem:[%s257 + $0x30] sm:$0xff]
    %v714 = vld [vmem:[%s257 + $0x38] sm:$0xff]
    %v715 = vld [vmem:[%s257 + $0x40] sm:$0xff]
    %v716 = vld [vmem:[%s257 + $0x48] sm:$0xff]
    %v717 = vld [vmem:[%s257 + $0x50] sm:$0xff]
    %v718 = vld [vmem:[%s257 + $0x58] sm:$0xff]
    %v719 = vld [vmem:[%s257 + $0x60] sm:$0xff]
    %v720 = vld [vmem:[%s257 + $0x68] sm:$0xff]
    %v721 = vld [vmem:[%s257 + $0x70] sm:$0xff]
    %v722 = vld [vmem:[%s257 + $0x78] sm:$0xff]
    %v723 = vld [vmem:[%s257 + $0x80] sm:$0xff]
    %v724 = vld [vmem:[%s257 + $0x88] sm:$0xff]
    %v725 = vld [vmem:[%s257 + $0x90] sm:$0xff]
    %v726 = vld [vmem:[%s257 + $0x98] sm:$0xff]
    %v727 = vld [vmem:[%s257 + $0xa0] sm:$0xff]
    %v728 = vld [vmem:[%s257 + $0xa8] sm:$0xff]
    %v729 = vld [vmem:[%s257 + $0xb0] sm:$0xff]
    %v730 = vld [vmem:[%s257 + $0xb8] sm:$0xff]
    %v731 = vld [vmem:[%s257 + $0xc0] sm:$0xff]
    %v732 = vld [vmem:[%s257 + $0xc8] sm:$0xff]
    %v733 = vld [vmem:[%s257 + $0xd0] sm:$0xff]
    %v734 = vld [vmem:[%s257 + $0xd8] sm:$0xff]
    %v735 = vld [vmem:[%s257 + $0xe0] sm:$0xff]
    %v736 = vld [vmem:[%s257 + $0xe8] sm:$0xff]
    %v737 = vld [vmem:[%s257 + $0xf0] sm:$0xff]
    %v738 = vld [vmem:[%s257 + $0xf8] sm:$0xff]
    %739 = vmatprep.subr.mxu0 0.0
    %740 = vmatpush1.msra.mxu0 %v707
    %741 = vmatprep.subr.mxu0 0.0
    %742 = vmatpush1.msra.mxu0 %v708
    %743 = vmatprep.subr.mxu0 0.0
    %744 = vmatpush1.msra.mxu0 %v709
    %745 = vmatprep.subr.mxu0 0.0
    %746 = vmatpush1.msra.mxu0 %v710
    %747 = vmatprep.subr.mxu0 0.0
    %748 = vmatpush1.msra.mxu0 %v711
    %749 = vmatprep.subr.mxu0 0.0
    %750 = vmatpush1.msra.mxu0 %v712
    %751 = vmatprep.subr.mxu0 0.0
    %752 = vmatpush1.msra.mxu0 %v713
    %753 = vmatprep.subr.mxu0 0.0
    %754 = vmatpush1.msra.mxu0 %v714
    %755 = vmatprep.subr.mxu0 0.0
    %756 = vmatpush1.msra.mxu0 %v715
    %757 = vmatprep.subr.mxu0 0.0
    %758 = vmatpush1.msra.mxu0 %v716
    %759 = vmatprep.subr.mxu0 0.0
    %760 = vmatpush1.msra.mxu0 %v717
    %761 = vmatprep.subr.mxu0 0.0
    %762 = vmatpush1.msra.mxu0 %v718
    %763 = vmatprep.subr.mxu0 0.0
    %764 = vmatpush1.msra.mxu0 %v719
    %765 = vmatprep.subr.mxu0 0.0
    %766 = vmatpush1.msra.mxu0 %v720
    %767 = vmatprep.subr.mxu0 0.0
    %768 = vmatpush1.msra.mxu0 %v721
    %769 = vmatprep.subr.mxu0 0.0
    %770 = vmatpush1.msra.mxu0 %v722
    %771 = vmatprep.subr.mxu0 0.0
    %772 = vmatpush1.msra.mxu0 %v723
    %773 = vmatprep.subr.mxu0 0.0
    %774 = vmatpush1.msra.mxu0 %v724
    %775 = vmatprep.subr.mxu0 0.0
    %776 = vmatpush1.msra.mxu0 %v725
    %777 = vmatprep.subr.mxu0 0.0
    %778 = vmatpush1.msra.mxu0 %v726
    %779 = vmatprep.subr.mxu0 0.0
    %780 = vmatpush1.msra.mxu0 %v727
    %781 = vmatprep.subr.mxu0 0.0
    %782 = vmatpush1.msra.mxu0 %v728
    %783 = vmatprep.subr.mxu0 0.0
    %784 = vmatpush1.msra.mxu0 %v729
    %785 = vmatprep.subr.mxu0 0.0
    %786 = vmatpush1.msra.mxu0 %v730
    %787 = vmatprep.subr.mxu0 0.0
    %788 = vmatpush1.msra.mxu0 %v731
    %789 = vmatprep.subr.mxu0 0.0
    %790 = vmatpush1.msra.mxu0 %v732
    %791 = vmatprep.subr.mxu0 0.0
    %792 = vmatpush1.msra.mxu0 %v733
    %793 = vmatprep.subr.mxu0 0.0
    %794 = vmatpush1.msra.mxu0 %v734
    %795 = vmatprep.subr.mxu0 0.0
    %796 = vmatpush1.msra.mxu0 %v735
    %797 = vmatprep.subr.mxu0 0.0
    %798 = vmatpush1.msra.mxu0 %v736
    %799 = vmatprep.subr.mxu0 0.0
    %800 = vmatpush1.msra.mxu0 %v737
    %801 = vmatprep.subr.mxu0 0.0
    %802 = vmatpush1.msra.mxu0 %v738
    %803 = vmatprep.mubr.f32.mxu0 %v706
    %804 = vmatmul.mubr.f32.gmra.mrb[0].mxu0 %v705
    %v805 = vpop.f32.mrb[0].mxu0
    %v806 = vadd.f32 0.0, %v805
    %v807 = vpop.f32.mrb[0].mxu0
    %808 = vdwg.mxu0
    %v809 = vadd.f32 %v701, %v806
    %s810 = scalar_lea.vmem [#allocation2], 112
    %v811 = vld [vmem:[%s810] sm:$0xff]
    %v812 = vld [vmem:[%s810 + $0x8] sm:$0xff]
    %v813 = vld [vmem:[%s364] sm:$0xff]
    %v814 = vld [vmem:[%s364 + $0x8] sm:$0xff]
    %v815 = vld [vmem:[%s364 + $0x10] sm:$0xff]
    %v816 = vld [vmem:[%s364 + $0x18] sm:$0xff]
    %v817 = vld [vmem:[%s364 + $0x20] sm:$0xff]
    %v818 = vld [vmem:[%s364 + $0x28] sm:$0xff]
    %v819 = vld [vmem:[%s364 + $0x30] sm:$0xff]
    %v820 = vld [vmem:[%s364 + $0x38] sm:$0xff]
    %v821 = vld [vmem:[%s364 + $0x40] sm:$0xff]
    %v822 = vld [vmem:[%s364 + $0x48] sm:$0xff]
    %v823 = vld [vmem:[%s364 + $0x50] sm:$0xff]
    %v824 = vld [vmem:[%s364 + $0x58] sm:$0xff]
    %v825 = vld [vmem:[%s364 + $0x60] sm:$0xff]
    %v826 = vld [vmem:[%s364 + $0x68] sm:$0xff]
    %v827 = vld [vmem:[%s364 + $0x70] sm:$0xff]
    %v828 = vld [vmem:[%s364 + $0x78] sm:$0xff]
    %v829 = vld [vmem:[%s364 + $0x80] sm:$0xff]
    %v830 = vld [vmem:[%s364 + $0x88] sm:$0xff]
    %v831 = vld [vmem:[%s364 + $0x90] sm:$0xff]
    %v832 = vld [vmem:[%s364 + $0x98] sm:$0xff]
    %v833 = vld [vmem:[%s364 + $0xa0] sm:$0xff]
    %v834 = vld [vmem:[%s364 + $0xa8] sm:$0xff]
    %v835 = vld [vmem:[%s364 + $0xb0] sm:$0xff]
    %v836 = vld [vmem:[%s364 + $0xb8] sm:$0xff]
    %v837 = vld [vmem:[%s364 + $0xc0] sm:$0xff]
    %v838 = vld [vmem:[%s364 + $0xc8] sm:$0xff]
    %v839 = vld [vmem:[%s364 + $0xd0] sm:$0xff]
    %v840 = vld [vmem:[%s364 + $0xd8] sm:$0xff]
    %v841 = vld [vmem:[%s364 + $0xe0] sm:$0xff]
    %v842 = vld [vmem:[%s364 + $0xe8] sm:$0xff]
    %v843 = vld [vmem:[%s364 + $0xf0] sm:$0xff]
    %v844 = vld [vmem:[%s364 + $0xf8] sm:$0xff]
    %845 = vmatprep.subr.mxu0 0.0
    %846 = vmatpush1.msra.mxu0 %v813
    %847 = vmatprep.subr.mxu0 0.0
    %848 = vmatpush1.msra.mxu0 %v814
    %849 = vmatprep.subr.mxu0 0.0
    %850 = vmatpush1.msra.mxu0 %v815
    %851 = vmatprep.subr.mxu0 0.0
    %852 = vmatpush1.msra.mxu0 %v816
    %853 = vmatprep.subr.mxu0 0.0
    %854 = vmatpush1.msra.mxu0 %v817
    %855 = vmatprep.subr.mxu0 0.0
    %856 = vmatpush1.msra.mxu0 %v818
    %857 = vmatprep.subr.mxu0 0.0
    %858 = vmatpush1.msra.mxu0 %v819
    %859 = vmatprep.subr.mxu0 0.0
    %860 = vmatpush1.msra.mxu0 %v820
    %861 = vmatprep.subr.mxu0 0.0
    %862 = vmatpush1.msra.mxu0 %v821
    %863 = vmatprep.subr.mxu0 0.0
    %864 = vmatpush1.msra.mxu0 %v822
    %865 = vmatprep.subr.mxu0 0.0
    %866 = vmatpush1.msra.mxu0 %v823
    %867 = vmatprep.subr.mxu0 0.0
    %868 = vmatpush1.msra.mxu0 %v824
    %869 = vmatprep.subr.mxu0 0.0
    %870 = vmatpush1.msra.mxu0 %v825
    %871 = vmatprep.subr.mxu0 0.0
    %872 = vmatpush1.msra.mxu0 %v826
    %873 = vmatprep.subr.mxu0 0.0
    %874 = vmatpush1.msra.mxu0 %v827
    %875 = vmatprep.subr.mxu0 0.0
    %876 = vmatpush1.msra.mxu0 %v828
    %877 = vmatprep.subr.mxu0 0.0
    %878 = vmatpush1.msra.mxu0 %v829
    %879 = vmatprep.subr.mxu0 0.0
    %880 = vmatpush1.msra.mxu0 %v830
    %881 = vmatprep.subr.mxu0 0.0
    %882 = vmatpush1.msra.mxu0 %v831
    %883 = vmatprep.subr.mxu0 0.0
    %884 = vmatpush1.msra.mxu0 %v832
    %885 = vmatprep.subr.mxu0 0.0
    %886 = vmatpush1.msra.mxu0 %v833
    %887 = vmatprep.subr.mxu0 0.0
    %888 = vmatpush1.msra.mxu0 %v834
    %889 = vmatprep.subr.mxu0 0.0
    %890 = vmatpush1.msra.mxu0 %v835
    %891 = vmatprep.subr.mxu0 0.0
    %892 = vmatpush1.msra.mxu0 %v836
    %893 = vmatprep.subr.mxu0 0.0
    %894 = vmatpush1.msra.mxu0 %v837
    %895 = vmatprep.subr.mxu0 0.0
    %896 = vmatpush1.msra.mxu0 %v838
    %897 = vmatprep.subr.mxu0 0.0
    %898 = vmatpush1.msra.mxu0 %v839
    %899 = vmatprep.subr.mxu0 0.0
    %900 = vmatpush1.msra.mxu0 %v840
    %901 = vmatprep.subr.mxu0 0.0
    %902 = vmatpush1.msra.mxu0 %v841
    %903 = vmatprep.subr.mxu0 0.0
    %904 = vmatpush1.msra.mxu0 %v842
    %905 = vmatprep.subr.mxu0 0.0
    %906 = vmatpush1.msra.mxu0 %v843
    %907 = vmatprep.subr.mxu0 0.0
    %908 = vmatpush1.msra.mxu0 %v844
    %909 = vmatprep.mubr.f32.mxu0 %v812
    %910 = vmatmul.mubr.f32.gmra.mrb[0].mxu0 %v811
    %v911 = vpop.f32.mrb[0].mxu0
    %v912 = vadd.f32 0.0, %v911
    %v913 = vpop.f32.mrb[0].mxu0
    %914 = vdwg.mxu0
    %v915 = vadd.f32 %v809, %v912
    %v916 = vadd.f32 %v915, %v472
    %v917 = vmax.f32 %v916, 0.0
    %vm918 = vcmp.ne.f32.partialorder %v916, %v916
    %v919 = vadd.f32 %v916, 0.0
    %v920 = vand.u32 2147483647, %v916
    %v921 = vsub.f32 0.0, %v920
    %v922 = vmul.f32 %v921, 1.442695
    %v923 = vpow.pop %v922
    %v924 = vadd.f32 %v923, 1.0
    %v925 = vlog2.pop %v924
    %v926 = vmul.f32 %v925, 0.6931472
    %v927 = vmul.f32 -0.5, %v923
    %v928 = vadd.f32 %v927, 1.0
    %v929 = vmul.f32 %v928, %v923
    %v930 = vand.u32 2147483647, %v923
    %vm931 = vcmp.lt.f32.partialorder %v930, 0.0004427343
    %v932 = vsel %vm931, %v929, %v926
    %v933 = vadd.f32 %v917, %v932
    %v934 = vsel %vm918, %v919, %v933
    %s935 = scalar_lea.vmem [#allocation7], 8
    %936 = vst [vmem:[%s935] sm:$0xff] %v934
    // Predicated region
    $region22: #{tpu_custom_call.1} parent=1 // pred_check
      _
    $region23: #{tpu_custom_call.1} parent=1 // pred_check_branch
      %938 = sbr.rel (0) target = $region25
    $region24: #{tpu_custom_call.1} parent=1 // pred_region
      %s940 = ssub.s32 256, 256
      %941 = vsyncadd [#allocation4], %s940
      %s942 = sshll.u32 [#allocation7], 4
      %s943 = int_to_ptr.vmem [resolvable:$true] %s942
      %948 = dma.vmem_to_hbm [thread:$0]  %s943, 256, %s3, [#allocation4], 128, 128, 8
    $region25: #{tpu_custom_call.1} parent=1 // pred_fallthru
      _
    // Predicated region
    $region26: #{tpu_custom_call.1} parent=1 // pred_check
      _
    $region27: #{tpu_custom_call.1} parent=1 // pred_check_branch
      %950 = sbr.rel (0) target = $region29
    $region28: #{tpu_custom_call.1} parent=1 // pred_region
      %951 = dma.done [#allocation4], 256
    $region29: #{tpu_custom_call.1} parent=1 // pred_fallthru
      _
    %952 = vsyncpa [#allocation3], 1
    %953 = vsyncpa [#allocation6], 1
    %954 = vsyncpa [#allocation4], 1

</llo_original>
